<compile_context>
chip_gen: v7x
topology: tpu7x:2x2x1
jax: 0.10.0
libtpu: 0.0.40
codegen_flags: <defaults>
</compile_context>

<pallas_src>
import math

import jax
import jax.numpy as jnp
from jax.experimental import pallas as pl
from jax.experimental.pallas import tpu as pltpu

C_LIGHT = 299800000.0
EPS0 = 8.854e-12
MU0 = 4.0 * math.pi * 1e-7

_LANES = 128       # lane width (fast point axis)
_S_TILE_MAX = 64   # sublane rows per grid step -> up to 8192 points / step
_N_PAR = 2         # leading "parallel" grid axis (2 TCs on v7x)

_NB = 15           # base slab rows
_NJ = 27           # jacobian slab rows


def _make_kernel(has_jac: bool):
    """Kernel factory: with/without the Jacobian slab input."""

    def kernel(*refs):
        if has_jac:
            base_ref, jac_ref, acc_ref = refs
        else:
            base_ref, acc_ref = refs
            jac_ref = None

        # acc_ref is the resident output block [6, S, 128]; it accumulates
        # across the "arbitrary" grid axis.
        @pl.when(pl.program_id(1) == 0)
        def _():
            acc_ref[...] = jnp.zeros_like(acc_ref)

        E0, E1, E2 = base_ref[0], base_ref[1], base_ref[2]
        B0, B1, B2 = base_ref[3], base_ref[4], base_ref[5]
        J0, J1, J2 = base_ref[6], base_ref[7], base_ref[8]
        P0, P1, P2 = base_ref[9], base_ref[10], base_ref[11]
        rho = base_ref[12]
        epsr = base_ref[13]
        omega = base_ref[14]
        eps = epsr * EPS0

        if has_jac:
            g = jac_ref[...]                       # [27, S, 128]
            div_E = g[0] + g[4] + g[8]
            div_B = g[9] + g[13] + g[17]
            cEx = g[7] - g[5]                      # curl_x = d f_z/dy - d f_y/dz
            cEy = g[2] - g[6]
            cEz = g[3] - g[1]
            cHx = g[25] - g[23]
            cHy = g[20] - g[24]
            cHz = g[21] - g[19]
            ge = div_E * eps - rho * (1.0 / EPS0)
        else:
            # div/curl are exactly zero in the fallback path.
            ge = rho * (1.0 / EPS0)                # sign irrelevant (squared)

        # Gauss laws
        acc_ref[0] += ge * ge
        if has_jac:
            acc_ref[1] += div_B * div_B            # stays zero otherwise

        # Faraday: |curl E + i*omega*B|^2 = |curl E|^2 + |omega B|^2
        oB0, oB1, oB2 = omega * B0, omega * B1, omega * B2
        far = oB0 * oB0 + oB1 * oB1 + oB2 * oB2
        if has_jac:
            far = far + cEx * cEx + cEy * cEy + cEz * cEz
        acc_ref[2] += far

        # Ampere: |curl H - J - i*omega*eps*E|^2
        if has_jac:
            ax, ay, az = cHx - J0, cHy - J1, cHz - J2
        else:
            ax, ay, az = J0, J1, J2                # |0 - J|^2 == |J|^2
        oe = omega * eps
        iE0, iE1, iE2 = oe * E0, oe * E1, oe * E2
        acc_ref[3] += (ax * ax + ay * ay + az * az
                       + iE0 * iE0 + iE1 * iE1 + iE2 * iE2)

        # Boundary: points with max_i |pos_i| > 0.9 (padding has pos == 0)
        mask = (jnp.maximum(jnp.maximum(jnp.abs(P0), jnp.abs(P1)),
                            jnp.abs(P2)) > 0.9).astype(jnp.float32)
        acc_ref[4] += mask * (E0 * E0 + E1 * E1 + E2 * E2)
        acc_ref[5] += mask

    return kernel


def _round_up(x, m):
    return ((x + m - 1) // m) * m


def maxwell_physics_loss(predictions, positions,
                         grad_E=None, grad_B=None, grad_H=None):
    """JAX/Pallas equivalent of ImprovedMaxwellPhysicsLoss.forward."""
    E = jnp.asarray(predictions['electric_field'], jnp.float32)          # [N, 3]
    B = jnp.asarray(predictions['magnetic_field'], jnp.float32)          # [N, 3]
    rho = jnp.reshape(jnp.asarray(predictions['charge_density'],
                                  jnp.float32), (-1, 1))                 # [N, 1]
    J = jnp.asarray(predictions['current_density'], jnp.float32)         # [N, 3]
    eps_r = jnp.reshape(jnp.asarray(predictions['epsilon_r'],
                                    jnp.float32), (-1, 1))               # [N, 1]
    # mu_r only enters through grad_H (Jacobian of H = B/mu); not used here.
    _mu_r = jnp.asarray(predictions['mu_r'], jnp.float32)
    omega = jnp.reshape(jnp.asarray(predictions['omega'],
                                    jnp.float32), (-1, 1))               # [N, 1]
    positions = jnp.asarray(positions, jnp.float32)                      # [N, 3]

    N = E.shape[0]
    has_jac = (grad_E is not None) or (grad_B is not None) or (grad_H is not None)

    # ---- tiling: points on (sublane, lane) = (s_total, 128) -----------------
    s_req = pl.cdiv(N, _LANES)
    s_tile = min(_S_TILE_MAX, _round_up(max(1, pl.cdiv(s_req, _N_PAR)), 8))
    s_total = _round_up(s_req, _N_PAR * s_tile)
    num_arb = s_total // (_N_PAR * s_tile)
    Np = s_total * _LANES

    def slab(mat, rows):  # [N, rows] -> [rows, s_total, 128], zero-padded
        m = jnp.pad(mat.T, ((0, 0), (0, Np - N)))
        return m.reshape(rows, s_total, _LANES)

    base = jnp.concatenate([E, B, J, positions, rho, eps_r, omega], axis=1)
    base_slab = slab(base, _NB)

    idx = lambda p, a: (0, p * num_arb + a, 0)
    in_specs = [pl.BlockSpec((_NB, s_tile, _LANES), idx)]
    args = [base_slab]

    if has_jac:
        def as_jac(g):
            if g is None:
                return jnp.zeros((N, 9), jnp.float32)
            return jnp.asarray(g, jnp.float32).reshape(N, 9)
        jac = jnp.concatenate([as_jac(grad_E), as_jac(grad_B), as_jac(grad_H)],
                              axis=1)                                    # [N, 27]
        in_specs.append(pl.BlockSpec((_NJ, s_tile, _LANES), idx))
        args.append(slab(jac, _NJ))

    acc = pl.pallas_call(
        _make_kernel(has_jac),
        out_shape=jax.ShapeDtypeStruct((_N_PAR, 6, s_tile, _LANES), jnp.float32),
        grid_spec=pltpu.PrefetchScalarGridSpec(
            num_scalar_prefetch=0,
            grid=(_N_PAR, num_arb),
            in_specs=in_specs,
            out_specs=pl.BlockSpec((None, 6, s_tile, _LANES),
                                   lambda p, a: (p, 0, 0, 0)),
        ),
        compiler_params=pltpu.CompilerParams(
            dimension_semantics=("parallel", "arbitrary")),
    )(*args)

    # tiny final reduction (2*6*s_tile*128 floats) done by XLA in the wrapper
    sums = jnp.sum(acc, axis=(0, 2, 3))  # [6]
    gauss_e_sum, gauss_b_sum = sums[0], sums[1]
    faraday_sum, ampere_sum = sums[2], sums[3]
    bsum, bcnt = sums[4], sums[5]

    n = jnp.float32(N)
    loss_gauss_E = gauss_e_sum / n
    loss_gauss_B = gauss_b_sum / n
    loss_faraday = faraday_sum / (n * 3.0)
    loss_ampere = ampere_sum / (n * 3.0)
    loss_boundary = jnp.where(bcnt > 0,
                              bsum / (jnp.maximum(bcnt, 1.0) * 3.0),
                              jnp.float32(0.0))
    total = (loss_gauss_E + loss_gauss_B + loss_faraday
             + loss_ampere + loss_boundary)

    return {'gauss_electric': loss_gauss_E,
            'gauss_magnetic': loss_gauss_B,
            'faraday': loss_faraday,
            'ampere': loss_ampere,
            'boundary': loss_boundary,
            'total_physics': total}


def _reference(predictions, positions, grad_E=None, grad_B=None, grad_H=None):
    """Pure-JAX reference of the module's forward (derivatives as inputs)."""
    E = jnp.asarray(predictions['electric_field'], jnp.float32)
    B = jnp.asarray(predictions['magnetic_field'], jnp.float32)
    rho = jnp.reshape(jnp.asarray(predictions['charge_density'], jnp.float32), (-1,))
    J = jnp.asarray(predictions['current_density'], jnp.float32)
    eps_r = jnp.reshape(jnp.asarray(predictions['epsilon_r'], jnp.float32), (-1,))
    omega = jnp.reshape(jnp.asarray(predictions['omega'], jnp.float32), (-1,))
    positions = jnp.asarray(positions, jnp.float32)

    N = E.shape[0]
    z = jnp.zeros((N, 3, 3), jnp.float32)
    gE = z if grad_E is None else jnp.asarray(grad_E, jnp.float32)
    gB = z if grad_B is None else jnp.asarray(grad_B, jnp.float32)
    gH = z if grad_H is None else jnp.asarray(grad_H, jnp.float32)

    eps = eps_r * EPS0

    def div(g):
        return g[:, 0, 0] + g[:, 1, 1] + g[:, 2, 2]

    def curl(g):
        return jnp.stack([g[:, 2, 1] - g[:, 1, 2],
                          g[:, 0, 2] - g[:, 2, 0],
                          g[:, 1, 0] - g[:, 0, 1]], axis=1)

    div_E, div_B = div(gE), div(gB)
    curl_E, curl_H = curl(gE), curl(gH)

    gauss_e = div_E * eps - rho / EPS0
    far_re = curl_E
    far_im = omega[:, None] * B
    amp_re = curl_H - J
    amp_im = omega[:, None] * eps[:, None] * E

    loss_gauss_E = jnp.mean(gauss_e ** 2)
    loss_gauss_B = jnp.mean(div_B ** 2)
    loss_faraday = jnp.mean(far_re ** 2 + far_im ** 2)
    loss_ampere = jnp.mean(amp_re ** 2 + amp_im ** 2)

    mask = jnp.max(jnp.abs(positions), axis=1) > 0.9
    cnt = jnp.sum(mask.astype(jnp.float32))
    e2 = jnp.sum(E * E, axis=1)
    loss_boundary = jnp.where(
        cnt > 0,
        jnp.sum(jnp.where(mask, e2, 0.0)) / (jnp.maximum(cnt, 1.0) * 3.0),
        0.0)
    total = (loss_gauss_E + loss_gauss_B + loss_faraday
             + loss_ampere + loss_boundary)
    return {'gauss_electric': loss_gauss_E, 'gauss_magnetic': loss_gauss_B,
            'faraday': loss_faraday, 'ampere': loss_ampere,
            'boundary': loss_boundary, 'total_physics': total}


def _check(out, ref):
    for k in out:
        a = float(out[k])
        b = float(ref[k])
        denom = max(abs(b), 1e-30)
        assert abs(a - b) / denom < 1e-3, (k, a, b)


if __name__ == "__main__":
    key = jax.random.PRNGKey(0)
    ks = jax.random.split(key, 11)
    N = 256

    E = jax.random.normal(ks[0], (N, 3), jnp.float32)
    B = jax.random.normal(ks[1], (N, 3), jnp.float32)
    rho = jax.random.normal(ks[2], (N, 1), jnp.float32)
    J = jax.random.normal(ks[3], (N, 3), jnp.float32)
    eps_r = 1.0 + jax.random.uniform(ks[4], (N, 1), dtype=jnp.float32)
    mu_r = 1.0 + jax.random.uniform(ks[5], (N, 1), dtype=jnp.float32)
    omega = jax.random.uniform(ks[6], (N,), dtype=jnp.float32) * 1e6
    positions = jax.random.uniform(ks[7], (N, 3), dtype=jnp.float32,
                                   minval=-1.0, maxval=1.0)

    preds = {'electric_field': E, 'magnetic_field': B, 'charge_density': rho,
             'current_density': J, 'epsilon_r': eps_r, 'mu_r': mu_r,
             'omega': omega}

    # 1) fallback path (no Jacobians) -- what the PyTorch module actually hits
    out = jax.block_until_ready(maxwell_physics_loss(preds, positions))
    _check(out, _reference(preds, positions))

    # 2) explicit-Jacobian path
    gE = jax.random.normal(ks[8], (N, 3, 3), jnp.float32)
    gB = jax.random.normal(ks[9], (N, 3, 3), jnp.float32)
    gH = jax.random.normal(ks[10], (N, 3, 3), jnp.float32)
    out2 = jax.block_until_ready(
        maxwell_physics_loss(preds, positions, gE, gB, gH))
    _check(out2, _reference(preds, positions, gE, gB, gH))

    print("KERNEL_OK")
</pallas_src>

<mosaic_0001>
module attributes {stable_mosaic.version = 11 : i64} {
  func.func @kernel(%arg0: i32, %arg1: i32, %arg2: memref<15x8x128xf32, #tpu.memory_space<vmem>>, %arg3: memref<1x6x8x128xf32, #tpu.memory_space<vmem>>) attributes {dimension_semantics = [#tpu.dimension_semantics<parallel>, #tpu.dimension_semantics<arbitrary>], iteration_bounds = array<i64: 2, 1>, scalar_prefetch = 0 : i64, scratch_operands = 0 : i64, tpu.core_type = #tpu.core_type<tc>, window_params = [{transform_indices = @transform_0, window_bounds = array<i64: 15, 8, 128>}, {transform_indices = @transform_1, window_bounds = array<i64: 1, 6, 8, 128>}]} {
    %c0_i32 = arith.constant 0 : i32
    %0 = arith.cmpi eq, %arg1, %c0_i32 : i32
    %1 = arith.extui %0 : i1 to i32
    %c0_i32_0 = arith.constant 0 : i32
    %2 = arith.cmpi ne, %1, %c0_i32_0 : i32
    scf.if %2 {
      %cst_73 = arith.constant 0.000000e+00 : f32
      %106 = vector.broadcast %cst_73 : f32 to vector<6x8x128xf32>
      %c0_74 = arith.constant 0 : index
      %c0_75 = arith.constant 0 : index
      %c0_76 = arith.constant 0 : index
      %c0_77 = arith.constant 0 : index
      %107 = vector.load %arg3[%c0_74, %c0_75, %c0_76, %c0_77] : memref<1x6x8x128xf32, #tpu.memory_space<vmem>>, vector<1x6x8x128xf32>
      %108 = vector.shape_cast %107 : vector<1x6x8x128xf32> to vector<6x8x128xf32>
      %109 = vector.shape_cast %106 : vector<6x8x128xf32> to vector<1x6x8x128xf32>
      tpu.vector_store %arg3[%c0_74, %c0_75, %c0_76, %c0_77], %109 {strides = array<i32>} : memref<1x6x8x128xf32, #tpu.memory_space<vmem>>, vector<1x6x8x128xf32>,
    } else {
    }
    %c0 = arith.constant 0 : index
    %c0_1 = arith.constant 0 : index
    %c0_2 = arith.constant 0 : index
    %3 = vector.load %arg2[%c0, %c0_1, %c0_2] : memref<15x8x128xf32, #tpu.memory_space<vmem>>, vector<1x8x128xf32>
    %4 = vector.shape_cast %3 : vector<1x8x128xf32> to vector<8x128xf32>
    %c1 = arith.constant 1 : index
    %c0_3 = arith.constant 0 : index
    %c0_4 = arith.constant 0 : index
    %5 = vector.load %arg2[%c1, %c0_3, %c0_4] : memref<15x8x128xf32, #tpu.memory_space<vmem>>, vector<1x8x128xf32>
    %6 = vector.shape_cast %5 : vector<1x8x128xf32> to vector<8x128xf32>
    %c2 = arith.constant 2 : index
    %c0_5 = arith.constant 0 : index
    %c0_6 = arith.constant 0 : index
    %7 = vector.load %arg2[%c2, %c0_5, %c0_6] : memref<15x8x128xf32, #tpu.memory_space<vmem>>, vector<1x8x128xf32>
    %8 = vector.shape_cast %7 : vector<1x8x128xf32> to vector<8x128xf32>
    %c3 = arith.constant 3 : index
    %c0_7 = arith.constant 0 : index
    %c0_8 = arith.constant 0 : index
    %9 = vector.load %arg2[%c3, %c0_7, %c0_8] : memref<15x8x128xf32, #tpu.memory_space<vmem>>, vector<1x8x128xf32>
    %10 = vector.shape_cast %9 : vector<1x8x128xf32> to vector<8x128xf32>
    %c4 = arith.constant 4 : index
    %c0_9 = arith.constant 0 : index
    %c0_10 = arith.constant 0 : index
    %11 = vector.load %arg2[%c4, %c0_9, %c0_10] : memref<15x8x128xf32, #tpu.memory_space<vmem>>, vector<1x8x128xf32>
    %12 = vector.shape_cast %11 : vector<1x8x128xf32> to vector<8x128xf32>
    %c5 = arith.constant 5 : index
    %c0_11 = arith.constant 0 : index
    %c0_12 = arith.constant 0 : index
    %13 = vector.load %arg2[%c5, %c0_11, %c0_12] : memref<15x8x128xf32, #tpu.memory_space<vmem>>, vector<1x8x128xf32>
    %14 = vector.shape_cast %13 : vector<1x8x128xf32> to vector<8x128xf32>
    %c6 = arith.constant 6 : index
    %c0_13 = arith.constant 0 : index
    %c0_14 = arith.constant 0 : index
    %15 = vector.load %arg2[%c6, %c0_13, %c0_14] : memref<15x8x128xf32, #tpu.memory_space<vmem>>, vector<1x8x128xf32>
    %16 = vector.shape_cast %15 : vector<1x8x128xf32> to vector<8x128xf32>
    %c7 = arith.constant 7 : index
    %c0_15 = arith.constant 0 : index
    %c0_16 = arith.constant 0 : index
    %17 = vector.load %arg2[%c7, %c0_15, %c0_16] : memref<15x8x128xf32, #tpu.memory_space<vmem>>, vector<1x8x128xf32>
    %18 = vector.shape_cast %17 : vector<1x8x128xf32> to vector<8x128xf32>
    %c8 = arith.constant 8 : index
    %c0_17 = arith.constant 0 : index
    %c0_18 = arith.constant 0 : index
    %19 = vector.load %arg2[%c8, %c0_17, %c0_18] : memref<15x8x128xf32, #tpu.memory_space<vmem>>, vector<1x8x128xf32>
    %20 = vector.shape_cast %19 : vector<1x8x128xf32> to vector<8x128xf32>
    %c9 = arith.constant 9 : index
    %c0_19 = arith.constant 0 : index
    %c0_20 = arith.constant 0 : index
    %21 = vector.load %arg2[%c9, %c0_19, %c0_20] : memref<15x8x128xf32, #tpu.memory_space<vmem>>, vector<1x8x128xf32>
    %22 = vector.shape_cast %21 : vector<1x8x128xf32> to vector<8x128xf32>
    %c10 = arith.constant 10 : index
    %c0_21 = arith.constant 0 : index
    %c0_22 = arith.constant 0 : index
    %23 = vector.load %arg2[%c10, %c0_21, %c0_22] : memref<15x8x128xf32, #tpu.memory_space<vmem>>, vector<1x8x128xf32>
    %24 = vector.shape_cast %23 : vector<1x8x128xf32> to vector<8x128xf32>
    %c11 = arith.constant 11 : index
    %c0_23 = arith.constant 0 : index
    %c0_24 = arith.constant 0 : index
    %25 = vector.load %arg2[%c11, %c0_23, %c0_24] : memref<15x8x128xf32, #tpu.memory_space<vmem>>, vector<1x8x128xf32>
    %26 = vector.shape_cast %25 : vector<1x8x128xf32> to vector<8x128xf32>
    %c12 = arith.constant 12 : index
    %c0_25 = arith.constant 0 : index
    %c0_26 = arith.constant 0 : index
    %27 = vector.load %arg2[%c12, %c0_25, %c0_26] : memref<15x8x128xf32, #tpu.memory_space<vmem>>, vector<1x8x128xf32>
    %28 = vector.shape_cast %27 : vector<1x8x128xf32> to vector<8x128xf32>
    %c13 = arith.constant 13 : index
    %c0_27 = arith.constant 0 : index
    %c0_28 = arith.constant 0 : index
    %29 = vector.load %arg2[%c13, %c0_27, %c0_28] : memref<15x8x128xf32, #tpu.memory_space<vmem>>, vector<1x8x128xf32>
    %30 = vector.shape_cast %29 : vector<1x8x128xf32> to vector<8x128xf32>
    %c14 = arith.constant 14 : index
    %c0_29 = arith.constant 0 : index
    %c0_30 = arith.constant 0 : index
    %31 = vector.load %arg2[%c14, %c0_29, %c0_30] : memref<15x8x128xf32, #tpu.memory_space<vmem>>, vector<1x8x128xf32>
    %32 = vector.shape_cast %31 : vector<1x8x128xf32> to vector<8x128xf32>
    %cst = arith.constant 8.85399999E-12 : f32
    %33 = vector.broadcast %cst : f32 to vector<8x128xf32>
    %34 = arith.mulf %30, %33 : vector<8x128xf32>
    %cst_31 = arith.constant 1.12943301E+11 : f32
    %35 = vector.broadcast %cst_31 : f32 to vector<8x128xf32>
    %36 = arith.mulf %28, %35 : vector<8x128xf32>
    %c0_32 = arith.constant 0 : index
    %c0_33 = arith.constant 0 : index
    %c0_34 = arith.constant 0 : index
    %c0_35 = arith.constant 0 : index
    %37 = vector.load %arg3[%c0_32, %c0_33, %c0_34, %c0_35] : memref<1x6x8x128xf32, #tpu.memory_space<vmem>>, vector<1x1x8x128xf32>
    %38 = vector.shape_cast %37 : vector<1x1x8x128xf32> to vector<8x128xf32>
    %39 = arith.mulf %36, %36 : vector<8x128xf32>
    %40 = arith.addf %38, %39 : vector<8x128xf32>
    %c0_36 = arith.constant 0 : index
    %c0_37 = arith.constant 0 : index
    %c0_38 = arith.constant 0 : index
    %c0_39 = arith.constant 0 : index
    %41 = vector.load %arg3[%c0_36, %c0_37, %c0_38, %c0_39] : memref<1x6x8x128xf32, #tpu.memory_space<vmem>>, vector<1x1x8x128xf32>
    %42 = vector.shape_cast %41 : vector<1x1x8x128xf32> to vector<8x128xf32>
    %43 = vector.shape_cast %40 : vector<8x128xf32> to vector<1x1x8x128xf32>
    tpu.vector_store %arg3[%c0_36, %c0_37, %c0_38, %c0_39], %43 {strides = array<i32>} : memref<1x6x8x128xf32, #tpu.memory_space<vmem>>, vector<1x1x8x128xf32>,
    %44 = arith.mulf %32, %10 : vector<8x128xf32>
    %45 = arith.mulf %32, %12 : vector<8x128xf32>
    %46 = arith.mulf %32, %14 : vector<8x128xf32>
    %47 = arith.mulf %44, %44 : vector<8x128xf32>
    %48 = arith.mulf %45, %45 : vector<8x128xf32>
    %49 = arith.addf %47, %48 : vector<8x128xf32>
    %50 = arith.mulf %46, %46 : vector<8x128xf32>
    %51 = arith.addf %49, %50 : vector<8x128xf32>
    %c0_40 = arith.constant 0 : index
    %c2_41 = arith.constant 2 : index
    %c0_42 = arith.constant 0 : index
    %c0_43 = arith.constant 0 : index
    %52 = vector.load %arg3[%c0_40, %c2_41, %c0_42, %c0_43] : memref<1x6x8x128xf32, #tpu.memory_space<vmem>>, vector<1x1x8x128xf32>
    %53 = vector.shape_cast %52 : vector<1x1x8x128xf32> to vector<8x128xf32>
    %54 = arith.addf %53, %51 : vector<8x128xf32>
    %c0_44 = arith.constant 0 : index
    %c2_45 = arith.constant 2 : index
    %c0_46 = arith.constant 0 : index
    %c0_47 = arith.constant 0 : index
    %55 = vector.load %arg3[%c0_44, %c2_45, %c0_46, %c0_47] : memref<1x6x8x128xf32, #tpu.memory_space<vmem>>, vector<1x1x8x128xf32>
    %56 = vector.shape_cast %55 : vector<1x1x8x128xf32> to vector<8x128xf32>
    %57 = vector.shape_cast %54 : vector<8x128xf32> to vector<1x1x8x128xf32>
    tpu.vector_store %arg3[%c0_44, %c2_45, %c0_46, %c0_47], %57 {strides = array<i32>} : memref<1x6x8x128xf32, #tpu.memory_space<vmem>>, vector<1x1x8x128xf32>,
    %58 = arith.mulf %32, %34 : vector<8x128xf32>
    %59 = arith.mulf %58, %4 : vector<8x128xf32>
    %60 = arith.mulf %58, %6 : vector<8x128xf32>
    %61 = arith.mulf %58, %8 : vector<8x128xf32>
    %c0_48 = arith.constant 0 : index
    %c3_49 = arith.constant 3 : index
    %c0_50 = arith.constant 0 : index
    %c0_51 = arith.constant 0 : index
    %62 = vector.load %arg3[%c0_48, %c3_49, %c0_50, %c0_51] : memref<1x6x8x128xf32, #tpu.memory_space<vmem>>, vector<1x1x8x128xf32>
    %63 = vector.shape_cast %62 : vector<1x1x8x128xf32> to vector<8x128xf32>
    %64 = arith.mulf %16, %16 : vector<8x128xf32>
    %65 = arith.mulf %18, %18 : vector<8x128xf32>
    %66 = arith.addf %64, %65 : vector<8x128xf32>
    %67 = arith.mulf %20, %20 : vector<8x128xf32>
    %68 = arith.addf %66, %67 : vector<8x128xf32>
    %69 = arith.mulf %59, %59 : vector<8x128xf32>
    %70 = arith.addf %68, %69 : vector<8x128xf32>
    %71 = arith.mulf %60, %60 : vector<8x128xf32>
    %72 = arith.addf %70, %71 : vector<8x128xf32>
    %73 = arith.mulf %61, %61 : vector<8x128xf32>
    %74 = arith.addf %72, %73 : vector<8x128xf32>
    %75 = arith.addf %63, %74 : vector<8x128xf32>
    %c0_52 = arith.constant 0 : index
    %c3_53 = arith.constant 3 : index
    %c0_54 = arith.constant 0 : index
    %c0_55 = arith.constant 0 : index
    %76 = vector.load %arg3[%c0_52, %c3_53, %c0_54, %c0_55] : memref<1x6x8x128xf32, #tpu.memory_space<vmem>>, vector<1x1x8x128xf32>
    %77 = vector.shape_cast %76 : vector<1x1x8x128xf32> to vector<8x128xf32>
    %78 = vector.shape_cast %75 : vector<8x128xf32> to vector<1x1x8x128xf32>
    tpu.vector_store %arg3[%c0_52, %c3_53, %c0_54, %c0_55], %78 {strides = array<i32>} : memref<1x6x8x128xf32, #tpu.memory_space<vmem>>, vector<1x1x8x128xf32>,
    %79 = math.absf %22 : vector<8x128xf32>
    %80 = math.absf %24 : vector<8x128xf32>
    %81 = arith.maximumf %79, %80 : vector<8x128xf32>
    %82 = math.absf %26 : vector<8x128xf32>
    %83 = arith.maximumf %81, %82 : vector<8x128xf32>
    %cst_56 = arith.constant 0.899999976 : f32
    %84 = vector.broadcast %cst_56 : f32 to vector<8x128xf32>
    %85 = arith.cmpf ogt, %83, %84 : vector<8x128xf32>
    %86 = arith.extui %85 : vector<8x128xi1> to vector<8x128xi32>
    %87 = arith.sitofp %86 : vector<8x128xi32> to vector<8x128xf32>
    %c0_57 = arith.constant 0 : index
    %c4_58 = arith.constant 4 : index
    %c0_59 = arith.constant 0 : index
    %c0_60 = arith.constant 0 : index
    %88 = vector.load %arg3[%c0_57, %c4_58, %c0_59, %c0_60] : memref<1x6x8x128xf32, #tpu.memory_space<vmem>>, vector<1x1x8x128xf32>
    %89 = vector.shape_cast %88 : vector<1x1x8x128xf32> to vector<8x128xf32>
    %90 = arith.mulf %4, %4 : vector<8x128xf32>
    %91 = arith.mulf %6, %6 : vector<8x128xf32>
    %92 = arith.addf %90, %91 : vector<8x128xf32>
    %93 = arith.mulf %8, %8 : vector<8x128xf32>
    %94 = arith.addf %92, %93 : vector<8x128xf32>
    %95 = arith.mulf %87, %94 : vector<8x128xf32>
    %96 = arith.addf %89, %95 : vector<8x128xf32>
    %c0_61 = arith.constant 0 : index
    %c4_62 = arith.constant 4 : index
    %c0_63 = arith.constant 0 : index
    %c0_64 = arith.constant 0 : index
    %97 = vector.load %arg3[%c0_61, %c4_62, %c0_63, %c0_64] : memref<1x6x8x128xf32, #tpu.memory_space<vmem>>, vector<1x1x8x128xf32>
    %98 = vector.shape_cast %97 : vector<1x1x8x128xf32> to vector<8x128xf32>
    %99 = vector.shape_cast %96 : vector<8x128xf32> to vector<1x1x8x128xf32>
    tpu.vector_store %arg3[%c0_61, %c4_62, %c0_63, %c0_64], %99 {strides = array<i32>} : memref<1x6x8x128xf32, #tpu.memory_space<vmem>>, vector<1x1x8x128xf32>,
    %c0_65 = arith.constant 0 : index
    %c5_66 = arith.constant 5 : index
    %c0_67 = arith.constant 0 : index
    %c0_68 = arith.constant 0 : index
    %100 = vector.load %arg3[%c0_65, %c5_66, %c0_67, %c0_68] : memref<1x6x8x128xf32, #tpu.memory_space<vmem>>, vector<1x1x8x128xf32>
    %101 = vector.shape_cast %100 : vector<1x1x8x128xf32> to vector<8x128xf32>
    %102 = arith.addf %101, %87 : vector<8x128xf32>
    %c0_69 = arith.constant 0 : index
    %c5_70 = arith.constant 5 : index
    %c0_71 = arith.constant 0 : index
    %c0_72 = arith.constant 0 : index
    %103 = vector.load %arg3[%c0_69, %c5_70, %c0_71, %c0_72] : memref<1x6x8x128xf32, #tpu.memory_space<vmem>>, vector<1x1x8x128xf32>
    %104 = vector.shape_cast %103 : vector<1x1x8x128xf32> to vector<8x128xf32>
    %105 = vector.shape_cast %102 : vector<8x128xf32> to vector<1x1x8x128xf32>
    tpu.vector_store %arg3[%c0_69, %c5_70, %c0_71, %c0_72], %105 {strides = array<i32>} : memref<1x6x8x128xf32, #tpu.memory_space<vmem>>, vector<1x1x8x128xf32>,
    return
  }
  func.func @transform_0(%arg0: i32, %arg1: i32) -> (i32, i32, i32) {
    %c1_i32 = arith.constant 1 : i32
    %0 = arith.muli %arg0, %c1_i32 : i32
    %1 = arith.addi %0, %arg1 : i32
    %c0_i32 = arith.constant 0 : i32
    %c0_i32_0 = arith.constant 0 : i32
    %c0_i32_1 = arith.constant 0 : i32
    return %c0_i32, %1, %c0_i32_0 : i32, i32, i32
  }
  func.func @transform_1(%arg0: i32, %arg1: i32) -> (i32, i32, i32, i32) {
    %c0_i32 = arith.constant 0 : i32
    %c0_i32_0 = arith.constant 0 : i32
    %c0_i32_1 = arith.constant 0 : i32
    %c0_i32_2 = arith.constant 0 : i32
    return %arg0, %c0_i32, %c0_i32_0, %c0_i32_1 : i32, i32, i32, i32
  }
}

</mosaic_0001>

<llo_original>
// kernel: tpu_custom_call.1
$region0: #{tpu_custom_call.1}
  #allocation0 [shape = 'u32[]', space=smem, size = 0x4, offset = 0x4, fixed_abs, tag = 'smem constant byte address 0x4 - core index']
  #allocation1 [shape = 'u32[144,128]{1,0:T(1,128)}', space=vmem, size = 0x12000, scoped, tag = 'internal scratch']
  %s0 = inlined_call_operand.hbm [shape: f32[15,16,128], index: 0, kind: input, shape index: {}]
  %s1 = inlined_call_operand.hbm [shape: f32[2,6,8,128], index: 1, kind: output, shape index: {}]
  %s2 = sld [smem:[#allocation0]]
  $region45: #{tpu_custom_call.1} parent=0
    _
  %s4 = ssub.s32 1, %s2
  %s5 = scalar_select 0, %s4, %s2
  $region1: #{tpu_custom_call.1} parent=0
    #allocation2 [shape = 'u8[122880]{0}', space=vmem, size = 0x1e000, scoped, tag = 'input window, operand 0']
    #allocation3 [shape = 's32[2]{0}', space=sflag, size = 0x8, scoped, tag = 'scoped memory for tpu_custom_call.1']
    #allocation4 [shape = 's32[2]{0}', space=sflag, size = 0x8, scoped, tag = 'scoped memory for tpu_custom_call.1']
    #allocation5 [shape = 'u8[49152]{0}', space=vmem, size = 0xc000, scoped, tag = 'output window, operand 0']
    %6 = vsyncpa [#allocation3], 0
    %s7 = scalar_lea.sflag [#allocation3], 1
    %8 = vsyncpa %s7, 0
    %9 = vsyncpa [#allocation4], 0
    %s10 = scalar_lea.sflag [#allocation4], 1
    %11 = vsyncpa %s10, 0
    loop: start=0, step=1, limit=4
    $region2: #{tpu_custom_call.1} parent=1 // loop_pre_header
      _
    $region3: #{tpu_custom_call.1} parent=1 // loop_header
      %s13 = sphi 0, %s17
      %p14 = scmp.ge.s32.totalorder %s13, 4
      %s20 = sphi 0, %s32
      %s21 = sphi 0, %s28
      %s22 = sphi 0, %s20
      %s23 = sphi 0, %s21
      %s24 = sphi 0, %s22
      %s25 = sphi 0, %s23
      %s37 = sphi 0, %s39
      %s40 = sphi 0, %s37
      %s41 = sphi 0, %s40
      %s57 = sphi 0, %s41
      %s63 = sphi 0, %s65
      %s66 = sphi 0, %s63
      %s67 = sphi 0, %s66
      %s83 = sphi 0, %s67
    $region4: #{tpu_custom_call.1} parent=1 // loop_header_branch
      %16 = sbr.rel (%p14) target = $region8
    $region5: #{tpu_custom_call.1} parent=1 // loop_body
      %s18 = ssub.s32 %s13, 1
      %s19 = ssub.s32 %s13, 2
      %s26 = sadd.s32 1, %s21
      %p27 = scmp.ge.s32.totalorder %s26, 1
      %s28 = scalar_select %p27, 0, %s26
      %s29 = sadd.s32 1, %s20
      %s30 = scalar_select %p27, %s29, %s20
      %p31 = scmp.ge.s32.totalorder %s30, 2
      %s32 = scalar_select %p31, 0, %s30
      %s33 = sadd.s32 %s20, %s21
      %s34 = sadd.s32 %s32, %s28
      %s35 = ssub.s32 %s33, %s34
      %p36 = scmp.eq.s32.totalorder %s35, 0
      %s38 = sadd.s32 %s37, 1
      %s39 = scalar_select %p36, %s37, %s38
      %p42 = pneg %p36
      %p43 = scmp.eq.s32.totalorder %s13, 1
      %p44 = por %p42, %p43
      %p45 = scmp.ne.s32.totalorder %s37, %s40
      %p46 = scmp.eq.s32.totalorder %s13, 0
      %p47 = por %p45, %p46
      %p48 = scmp.ne.s32.totalorder %s37, %s40
      %p49 = scmp.eq.s32.totalorder %s18, 1
      %p50 = por %p48, %p49
      %p51 = scmp.ne.s32.totalorder %s40, %s41
      %p52 = scmp.eq.s32.totalorder %s18, 0
      %p53 = por %p51, %p52
      %p54 = scmp.ne.s32.totalorder %s40, %s41
      %p55 = scmp.eq.s32.totalorder %s19, 1
      %p56 = por %p54, %p55
      %p58 = scmp.ne.s32.totalorder %s41, %s57
      %p59 = scmp.eq.s32.totalorder %s19, 0
      %p60 = por %p58, %p59
      %s61 = ssub.s32 %s20, %s32
      %p62 = scmp.eq.s32.totalorder %s61, 0
      %s64 = sadd.s32 %s63, 1
      %s65 = scalar_select %p62, %s63, %s64
      %p68 = pneg %p62
      %p69 = scmp.eq.s32.totalorder %s13, 1
      %p70 = por %p68, %p69
      %p71 = scmp.ne.s32.totalorder %s63, %s66
      %p72 = scmp.eq.s32.totalorder %s13, 0
      %p73 = por %p71, %p72
      %p74 = scmp.ne.s32.totalorder %s63, %s66
      %p75 = scmp.eq.s32.totalorder %s18, 1
      %p76 = por %p74, %p75
      %p77 = scmp.ne.s32.totalorder %s66, %s67
      %p78 = scmp.eq.s32.totalorder %s18, 0
      %p79 = por %p77, %p78
      %p80 = scmp.ne.s32.totalorder %s66, %s67
      %p81 = scmp.eq.s32.totalorder %s19, 1
      %p82 = por %p80, %p81
      %p84 = scmp.ne.s32.totalorder %s67, %s83
      %p85 = scmp.eq.s32.totalorder %s19, 0
      %p86 = por %p84, %p85
      %p87 = scmp.le.s32.totalorder 1, %s13
      %p88 = scmp.lt.s32.totalorder %s13, 3
      %p89 = pnand %p87, %p88
      %p90 = pneg %p89
      // Predicated region
      $region9: #{tpu_custom_call.1} parent=5 // pred_check
        _
      $region10: #{tpu_custom_call.1} parent=5 // pred_check_branch
        %92 = sbr.rel (%p89) target = $region12
      $region11: #{tpu_custom_call.1} parent=5 // pred_region
        %s93 = ssub.s32 %s13, 1
      $region12: #{tpu_custom_call.1} parent=5 // pred_fallthru
        _
      %p94 = scmp.lt.s32.totalorder %s13, 2
      // Predicated region
      $region13: #{tpu_custom_call.1} parent=5 // pred_check
        %p95 = pneg %p94
      $region14: #{tpu_custom_call.1} parent=5 // pred_check_branch
        %97 = sbr.rel (%p95) target = $region16
      $region15: #{tpu_custom_call.1} parent=5 // pred_region
        // Predicated region
        $region17: #{tpu_custom_call.1} parent=15 // pred_check
          %p98 = pneg %p47
        $region18: #{tpu_custom_call.1} parent=15 // pred_check_branch
          %100 = sbr.rel (%p98) target = $region20
        $region19: #{tpu_custom_call.1} parent=15 // pred_region
          %s101 = sand.u32 %s37, 1
          %s102 = scalar_lea.sflag [#allocation3], %s101
          %s103 = sand.u32 %s37, 1
          %s104 = smul.addr %s103, 120
          %s105 = scalar_lea.vmem [#allocation2], %s104
          %s106 = sadd.s32 %s20, %s21
          %s108 = ssub.s32 1920, 1920
          %109 = vsyncadd %s102, %s108
          %s110 = smul.addr %s106, 128
          %s111 = scalar_lea.hbm %s0, %s110
          %s112 = sshll.u32 %s105, 4
          %s113 = int_to_ptr.vmem [resolvable:$true] %s112
          %118 = dma.hbm_to_vmem [thread:$0]  %s111, 1920, %s113, %s102, 256, 128, 8
        $region20: #{tpu_custom_call.1} parent=15 // pred_fallthru
          _
      $region16: #{tpu_custom_call.1} parent=5 // pred_fallthru
        _
      %p119 = scmp.le.s32.totalorder 1, %s13
      %p120 = scmp.lt.s32.totalorder %s13, 3
      %p121 = pnand %p119, %p120
      %p122 = pneg %p121
      // Predicated region
      $region21: #{tpu_custom_call.1} parent=5 // pred_check
        _
      $region22: #{tpu_custom_call.1} parent=5 // pred_check_branch
        %124 = sbr.rel (%p121) target = $region24
      $region23: #{tpu_custom_call.1} parent=5 // pred_region
        %s125 = ssub.s32 %s13, 1
        %s126 = sand.u32 %s40, 1
        %s127 = scalar_lea.sflag [#allocation3], %s126
        %s128 = sand.u32 %s40, 1
        %s129 = smul.addr %s128, 120
        %s130 = scalar_lea.vmem [#allocation2], %s129
        // Predicated region
        $region25: #{tpu_custom_call.1} parent=23 // pred_check
          %p131 = pneg %p53
        $region26: #{tpu_custom_call.1} parent=23 // pred_check_branch
          %133 = sbr.rel (%p131) target = $region28
        $region27: #{tpu_custom_call.1} parent=23 // pred_region
          %134 = dma.done %s127, 1920
        $region28: #{tpu_custom_call.1} parent=23 // pred_fallthru
          _
        %s135 = sand.u32 %s40, 1
        %s136 = scalar_lea.sflag [#allocation3], %s135
        %s137 = sand.u32 %s40, 1
        %s138 = smul.addr %s137, 120
        %s139 = scalar_lea.vmem [#allocation2], %s138
        %p140 = pneg %p53
        %p141 = pneg %p50
        %p142 = pneg %p79
        %p143 = pneg %p76
        %s144 = sand.u32 %s66, 1
        %s145 = scalar_lea.sflag [#allocation4], %s144
        %s146 = sand.u32 %s66, 1
        %s147 = smul.addr %s146, 48
        %s148 = scalar_lea.vmem [#allocation5], %s147
        %s149 = sadd.s32 %s22, %s23
        %p150 = scmp.eq.s32.totalorder %s23, 0
        // Predicated region
        $region29: #{tpu_custom_call.1} parent=23 // pred_check
          %p151 = pneg %p150
        $region30: #{tpu_custom_call.1} parent=23 // pred_check_branch
          %153 = sbr.rel (%p151) target = $region32
        $region31: #{tpu_custom_call.1} parent=23 // pred_region
          %154 = vst [vmem:[%s148] sm:$0xff] 0.0
          %155 = vst [vmem:[%s148 + $0x8] sm:$0xff] 0.0
          %156 = vst [vmem:[%s148 + $0x10] sm:$0xff] 0.0
          %157 = vst [vmem:[%s148 + $0x18] sm:$0xff] 0.0
          %158 = vst [vmem:[%s148 + $0x20] sm:$0xff] 0.0
          %159 = vst [vmem:[%s148 + $0x28] sm:$0xff] 0.0
        $region32: #{tpu_custom_call.1} parent=23 // pred_fallthru
          _
        %v160 = vld [vmem:[%s130] sm:$0xff]
        %s161 = scalar_lea.vmem %s130, 8 [#allocation2]
        %v162 = vld [vmem:[%s161] sm:$0xff]
        %s163 = scalar_lea.vmem %s130, 16 [#allocation2]
        %v164 = vld [vmem:[%s163] sm:$0xff]
        %s165 = scalar_lea.vmem %s130, 24 [#allocation2]
        %v166 = vld [vmem:[%s165] sm:$0xff]
        %s167 = scalar_lea.vmem %s130, 32 [#allocation2]
        %v168 = vld [vmem:[%s167] sm:$0xff]
        %s169 = scalar_lea.vmem %s130, 40 [#allocation2]
        %v170 = vld [vmem:[%s169] sm:$0xff]
        %s171 = scalar_lea.vmem %s130, 48 [#allocation2]
        %v172 = vld [vmem:[%s171] sm:$0xff]
        %s173 = scalar_lea.vmem %s130, 56 [#allocation2]
        %v174 = vld [vmem:[%s173] sm:$0xff]
        %s175 = scalar_lea.vmem %s130, 64 [#allocation2]
        %v176 = vld [vmem:[%s175] sm:$0xff]
        %s177 = scalar_lea.vmem %s130, 72 [#allocation2]
        %v178 = vld [vmem:[%s177] sm:$0xff]
        %s179 = scalar_lea.vmem %s130, 80 [#allocation2]
        %v180 = vld [vmem:[%s179] sm:$0xff]
        %s181 = scalar_lea.vmem %s130, 88 [#allocation2]
        %v182 = vld [vmem:[%s181] sm:$0xff]
        %s183 = scalar_lea.vmem %s130, 96 [#allocation2]
        %v184 = vld [vmem:[%s183] sm:$0xff]
        %s185 = scalar_lea.vmem %s130, 104 [#allocation2]
        %v186 = vld [vmem:[%s185] sm:$0xff]
        %s187 = scalar_lea.vmem %s130, 112 [#allocation2]
        %v188 = vld [vmem:[%s187] sm:$0xff]
        %v189 = vmul.f32 %v186, 8.854e-12
        %v190 = vmul.f32 %v184, 1.129433e+11
        %v191 = vld [vmem:[%s148] sm:$0xff]
        %v192 = vmul.f32 %v190, %v190
        %v193 = vadd.f32 %v191, %v192
        %194 = vst [vmem:[%s148] sm:$0xff] %v193
        %v195 = vmul.f32 %v188, %v166
        %v196 = vmul.f32 %v188, %v168
        %v197 = vmul.f32 %v188, %v170
        %v198 = vmul.f32 %v195, %v195
        %v199 = vmul.f32 %v196, %v196
        %v200 = vadd.f32 %v198, %v199
        %v201 = vmul.f32 %v197, %v197
        %v202 = vadd.f32 %v200, %v201
        %s203 = scalar_lea.vmem %s148, 16 [#allocation5]
        %v204 = vld [vmem:[%s203] sm:$0xff]
        %v205 = vadd.f32 %v204, %v202
        %206 = vst [vmem:[%s203] sm:$0xff] %v205
        %v207 = vmul.f32 %v188, %v189
        %v208 = vmul.f32 %v207, %v160
        %v209 = vmul.f32 %v207, %v162
        %v210 = vmul.f32 %v207, %v164
        %s211 = scalar_lea.vmem %s148, 24 [#allocation5]
        %v212 = vld [vmem:[%s211] sm:$0xff]
        %v213 = vmul.f32 %v172, %v172
        %v214 = vmul.f32 %v174, %v174
        %v215 = vadd.f32 %v213, %v214
        %v216 = vmul.f32 %v176, %v176
        %v217 = vadd.f32 %v215, %v216
        %v218 = vmul.f32 %v208, %v208
        %v219 = vadd.f32 %v217, %v218
        %v220 = vmul.f32 %v209, %v209
        %v221 = vadd.f32 %v219, %v220
        %v222 = vmul.f32 %v210, %v210
        %v223 = vadd.f32 %v221, %v222
        %v224 = vadd.f32 %v212, %v223
        %225 = vst [vmem:[%s211] sm:$0xff] %v224
        %v226 = vand.u32 2147483647, %v178
        %v227 = vand.u32 2147483647, %v180
        %v228 = vmax.f32 %v226, %v227
        %v229 = vand.u32 2147483647, %v182
        %v230 = vmax.f32 %v228, %v229
        %vm231 = vcmp.gt.f32.partialorder %v230, 0.9
        %v232 = vsel %vm231, 1, 0
        %v233 = vcvt.s32.f32 %v232
        %s234 = scalar_lea.vmem %s148, 32 [#allocation5]
        %v235 = vld [vmem:[%s234] sm:$0xff]
        %v236 = vmul.f32 %v160, %v160
        %v237 = vmul.f32 %v162, %v162
        %v238 = vadd.f32 %v236, %v237
        %v239 = vmul.f32 %v164, %v164
        %v240 = vadd.f32 %v238, %v239
        %v241 = vmul.f32 %v233, %v240
        %v242 = vadd.f32 %v235, %v241
        %243 = vst [vmem:[%s234] sm:$0xff] %v242
        %s244 = scalar_lea.vmem %s148, 40 [#allocation5]
        %v245 = vld [vmem:[%s244] sm:$0xff]
        %v246 = vadd.f32 %v245, %v233
        %247 = vst [vmem:[%s244] sm:$0xff] %v246
        %s248 = sand.u32 %s66, 1
        %s249 = scalar_lea.sflag [#allocation4], %s248
        %s250 = sand.u32 %s66, 1
        %s251 = smul.addr %s250, 48
        %s252 = scalar_lea.vmem [#allocation5], %s251
        // Predicated region
        $region33: #{tpu_custom_call.1} parent=23 // pred_check
          %p253 = pneg %p76
        $region34: #{tpu_custom_call.1} parent=23 // pred_check_branch
          %255 = sbr.rel (%p253) target = $region36
        $region35: #{tpu_custom_call.1} parent=23 // pred_region
          %s257 = ssub.s32 768, 768
          %258 = vsyncadd %s249, %s257
          %s259 = smul.addr %s22, 6
          %s260 = smul.addr %s259, 128
          %s261 = scalar_lea.hbm %s1, %s260
          %s262 = sshll.u32 %s252, 4
          %s263 = int_to_ptr.vmem [resolvable:$true] %s262
          %268 = dma.vmem_to_hbm [thread:$0]  %s263, 768, %s261, %s249, 128, 128, 8
        $region36: #{tpu_custom_call.1} parent=23 // pred_fallthru
          _
      $region24: #{tpu_custom_call.1} parent=5 // pred_fallthru
        _
      %p269 = scmp.le.s32.totalorder 2, %s13
      // Predicated region
      $region37: #{tpu_custom_call.1} parent=5 // pred_check
        %p270 = pneg %p269
      $region38: #{tpu_custom_call.1} parent=5 // pred_check_branch
        %272 = sbr.rel (%p270) target = $region40
      $region39: #{tpu_custom_call.1} parent=5 // pred_region
        %s273 = ssub.s32 %s13, 2
        // Predicated region
        $region41: #{tpu_custom_call.1} parent=39 // pred_check
          %p274 = pneg %p82
        $region42: #{tpu_custom_call.1} parent=39 // pred_check_branch
          %276 = sbr.rel (%p274) target = $region44
        $region43: #{tpu_custom_call.1} parent=39 // pred_region
          %s277 = sand.u32 %s67, 1
          %s278 = scalar_lea.sflag [#allocation4], %s277
          %s279 = sand.u32 %s67, 1
          %s280 = smul.addr %s279, 48
          %s281 = scalar_lea.vmem [#allocation5], %s280
          %282 = dma.done %s278, 768
        $region44: #{tpu_custom_call.1} parent=39 // pred_fallthru
          _
      $region40: #{tpu_custom_call.1} parent=5 // pred_fallthru
        _
    $region6: #{tpu_custom_call.1} parent=1 // loop_footer
      %s17 = sadd.s32 1, %s13
    $region7: #{tpu_custom_call.1} parent=1 // loop_footer_branch
      %12 = sbr.rel target = $region3
    $region8: #{tpu_custom_call.1} parent=1 // loop_exit
      _
    %283 = vsyncpa [#allocation3], 1
    %s284 = scalar_lea.sflag [#allocation3], 1
    %285 = vsyncpa %s284, 1
    %286 = vsyncpa [#allocation4], 1
    %s287 = scalar_lea.sflag [#allocation4], 1
    %288 = vsyncpa %s287, 1

</llo_original>
